<compile_context>
chip_gen: v5e
topology: v5e:2x2
jax: 0.10.0
libtpu: 0.0.40
codegen_flags: <defaults>
</compile_context>

<pallas_src>
import jax
import jax.numpy as jnp
from jax.experimental import pallas as pl
from jax.experimental.pallas import tpu as pltpu

_LANE = 128
_VMEM_TARGET = 16 * 1024 * 1024      # working-set target, fits every generation
_VMEM_LIMIT = 32 * 1024 * 1024       # explicit scoped-VMEM limit (>= v5e default)


def _round_up(n, m):
    return ((n + m - 1) // m) * m


def _mlp_kernel(x_ref, w1_ref, b1_ref, w2_ref, b2_ref, o_ref):
    # Cast the streamed x tile to the weight dtype (no-op when producer sends
    # bf16); first linear on the MXU with f32 accumulation.
    x = x_ref[...].astype(w1_ref.dtype)                                   # (TB, D)
    h = jnp.dot(x, w1_ref[...], preferred_element_type=jnp.float32)       # (TB, HP)
    h = jnp.maximum(h + b1_ref[...], 0.0)
    # Second linear: contract the hidden axis of the (1, HP) W2 row against
    # the hidden axis of h -> lane-dense (1, TB) row; no explicit transpose.
    y = jax.lax.dot_general(
        w2_ref[...], h,
        dimension_numbers=(((1,), (1,)), ((), ())),
        preferred_element_type=jnp.float32,
    )                                                                      # (1, TB)
    o_ref[...] = (y + b2_ref[0, 0]).astype(o_ref.dtype)


def prepare_params(params, compute_dtype=jnp.bfloat16):
    """Pad hidden 100 -> 128 and cast W1 once (hoist out of the per-call path).

    Zero-padded hidden columns are harmless: the zero-padded W2 row kills them.
    """
    w1, b1, w2, b2 = params["w1"], params["b1"], params["w2"], params["b2"]
    D, H = w1.shape
    HP = _round_up(H, _LANE)
    return {
        "w1p": jnp.pad(w1, ((0, 0), (0, HP - H))).astype(compute_dtype),      # (D, HP)
        "b1p": jnp.pad(b1.reshape(1, H).astype(jnp.float32),
                       ((0, 0), (0, HP - H))),                                 # (1, HP)
        "w2p": jnp.pad(w2.reshape(1, H).astype(jnp.float32),
                       ((0, 0), (0, HP - H))),                                 # (1, HP)
        "b2p": b2.reshape(1, 1).astype(jnp.float32),                           # (1, 1)
    }


def _choose_batch_tile(B, D, x_itemsize, w1_bytes):
    # Size the x double-buffer against the VMEM working-set target.
    budget = _VMEM_TARGET - w1_bytes - (256 << 10)   # headroom for biases/output
    tb_cap = max(_LANE, (budget // max(2 * D * x_itemsize, 1)) // _LANE * _LANE)
    tb = int(min(1024, tb_cap, _round_up(B, _LANE)))
    # v7x has 2 TensorCores sharing the "parallel" grid axis: make sure a
    # mid-size batch produces at least 2 tiles so neither core idles.
    if B > _LANE and pl.cdiv(B, tb) < 2:
        tb = max(_LANE, _round_up(-(-B // 2), _LANE))
    return tb


def domain_discriminator_forward(x, prepared, lambda_=1.0):
    """Forward pass of DomainDiscriminator.

    grad_reverse(x, lambda_) is identity in forward, so `lambda_` does not
    affect the output here (see TODO at top of file for the backward rule).

    `prepared` is the output of `prepare_params` (padded/cast weights).
    """
    w1p, b1p, w2p, b2p = (prepared["w1p"], prepared["b1p"],
                          prepared["w2p"], prepared["b2p"])
    B, D = x.shape
    HP = w1p.shape[1]

    x_itemsize = jnp.dtype(x.dtype).itemsize
    w1_bytes = D * HP * jnp.dtype(w1p.dtype).itemsize
    tb = _choose_batch_tile(B, D, x_itemsize, w1_bytes)
    num_tiles = pl.cdiv(B, tb)
    Bp = num_tiles * tb                     # output is padded; x is NOT copied

    cost = pl.CostEstimate(
        flops=2 * B * D * HP + 2 * B * HP,
        transcendentals=0,
        bytes_accessed=(B * D * x_itemsize + w1_bytes + 2 * HP * 4 + 4 + Bp * 4),
    )

    out = pl.pallas_call(
        _mlp_kernel,
        out_shape=jax.ShapeDtypeStruct((1, Bp), jnp.float32),
        grid=(num_tiles,),
        in_specs=[
            pl.BlockSpec((tb, D), lambda i: (i, 0)),            # x streams (partial tail OK)
            pl.BlockSpec((D, HP), lambda i: (0, 0)),            # W1 resident (bf16)
            pl.BlockSpec((1, HP), lambda i: (0, 0)),            # b1 resident
            pl.BlockSpec((1, HP), lambda i: (0, 0)),            # W2 row resident
            pl.BlockSpec(memory_space=pltpu.MemorySpace.SMEM),  # b2 scalar in SMEM
        ],
        out_specs=pl.BlockSpec((1, tb), lambda i: (0, i)),      # lane-dense rows
        compiler_params=pltpu.CompilerParams(
            dimension_semantics=("parallel",),
            vmem_limit_bytes=_VMEM_LIMIT,
        ),
        cost_estimate=cost,
    )(x, w1p, b1p, w2p, b2p)

    # (1, Bp) lane-dense row -> (B, 1) column (padded tail entries discarded).
    return out[0, :B].reshape(B, 1)


def init_params(key, input_dim, hidden=100):
    """Deterministic init mirroring nn.Linear shapes (stored transposed)."""
    k1, k2, k3, k4 = jax.random.split(key, 4)
    lim1 = 1.0 / jnp.sqrt(input_dim)
    lim2 = 1.0 / jnp.sqrt(hidden)
    return {
        "w1": jax.random.uniform(k1, (input_dim, hidden), jnp.float32, -lim1, lim1),
        "b1": jax.random.uniform(k2, (1, hidden), jnp.float32, -lim1, lim1),
        "w2": jax.random.uniform(k3, (hidden, 1), jnp.float32, -lim2, lim2),
        "b2": jax.random.uniform(k4, (1, 1), jnp.float32, -lim2, lim2),
    }


if __name__ == "__main__":
    key = jax.random.PRNGKey(0)
    kx, kp = jax.random.split(key)

    B, D = 8, 32                        # small batch, input_dim=32
    x_f32 = jax.random.normal(kx, (B, D), jnp.float32)
    params = init_params(kp, D)

    prepared = prepare_params(params)   # hoisted: pad H->128, W1 -> bf16
    x = x_f32.astype(jnp.bfloat16)      # producer-side cast: bf16 streaming of x

    y = domain_discriminator_forward(x, prepared, lambda_=0.5)
    jax.block_until_ready(y)

    # Pure-JAX reference on the identically-rounded (bf16) inputs.
    xr = x.astype(jnp.float32)
    w1r = params["w1"].astype(jnp.bfloat16).astype(jnp.float32)
    h_ref = jnp.maximum(xr @ w1r + params["b1"].reshape(1, -1), 0.0)
    y_ref = h_ref @ params["w2"] + params["b2"].reshape(1, 1)

    assert y.shape == (B, 1)
    assert jnp.allclose(y, y_ref, atol=1e-3, rtol=1e-3), float(
        jnp.max(jnp.abs(y - y_ref))
    )

    print("KERNEL_OK")
</pallas_src>

<mosaic_0001>
module attributes {stable_mosaic.version = 11 : i64} {
  func.func @_mlp_kernel(%arg0: i32, %arg1: memref<128x32xbf16, #tpu.memory_space<vmem>>, %arg2: memref<32x128xbf16, #tpu.memory_space<vmem>>, %arg3: memref<1x128xf32, #tpu.memory_space<vmem>>, %arg4: memref<1x128xf32, #tpu.memory_space<vmem>>, %arg5: memref<1x1xf32, #tpu.memory_space<smem>>, %arg6: memref<1x128xf32, #tpu.memory_space<vmem>>) attributes {dimension_semantics = [#tpu.dimension_semantics<parallel>], iteration_bounds = array<i64: 1>, scalar_prefetch = 0 : i64, scratch_operands = 0 : i64, tpu.core_type = #tpu.core_type<tc>, window_params = [{transform_indices = @transform_0, window_bounds = array<i64: 128, 32>}, {pipeline_mode = #tpu.pipeline_mode<synchronous>, transform_indices = @transform_1, window_bounds = array<i64: 32, 128>}, {pipeline_mode = #tpu.pipeline_mode<synchronous>, transform_indices = @transform_2, window_bounds = array<i64: 1, 128>}, {pipeline_mode = #tpu.pipeline_mode<synchronous>, transform_indices = @transform_3, window_bounds = array<i64: 1, 128>}, {transform_indices = @transform_4, window_bounds = array<i64: 1, 1>}, {transform_indices = @transform_5, window_bounds = array<i64: 1, 128>}]} {
    %c0 = arith.constant 0 : index
    %c0_0 = arith.constant 0 : index
    %0 = vector.load %arg1[%c0, %c0_0] : memref<128x32xbf16, #tpu.memory_space<vmem>>, vector<128x32xbf16>
    %c0_1 = arith.constant 0 : index
    %c0_2 = arith.constant 0 : index
    %1 = vector.load %arg2[%c0_1, %c0_2] : memref<32x128xbf16, #tpu.memory_space<vmem>>, vector<32x128xbf16>
    %cst = arith.constant dense<0.000000e+00> : vector<128x128xf32>
    %2 = tpu.matmul %0, %1, %cst {dimension_numbers = #tpu.dot_dimension_numbers<[1], [0], [0], [1], [0, 0, 1, 1], [], []>} : vector<128x32xbf16>, vector<32x128xbf16>, vector<128x128xf32> -> vector<128x128xf32>
    %c0_3 = arith.constant 0 : index
    %c0_4 = arith.constant 0 : index
    %3 = vector.load %arg3[%c0_3, %c0_4] : memref<1x128xf32, #tpu.memory_space<vmem>>, vector<1x128xf32>
    %4 = vector.broadcast %3 : vector<1x128xf32> to vector<128x128xf32>
    %5 = arith.addf %2, %4 : vector<128x128xf32>
    %cst_5 = arith.constant 0.000000e+00 : f32
    %6 = vector.broadcast %cst_5 : f32 to vector<128x128xf32>
    %7 = arith.maximumf %5, %6 : vector<128x128xf32>
    %c0_6 = arith.constant 0 : index
    %c0_7 = arith.constant 0 : index
    %8 = vector.load %arg4[%c0_6, %c0_7] : memref<1x128xf32, #tpu.memory_space<vmem>>, vector<1x128xf32>
    %cst_8 = arith.constant dense<0.000000e+00> : vector<1x128xf32>
    %9 = tpu.matmul %8, %7, %cst_8 {dimension_numbers = #tpu.dot_dimension_numbers<[1], [1], [0], [0], [0, 0, 1, 0], [], []>} : vector<1x128xf32>, vector<128x128xf32>, vector<1x128xf32> -> vector<1x128xf32>
    %c0_9 = arith.constant 0 : index
    %c0_10 = arith.constant 0 : index
    %10 = memref.load %arg5[%c0_9, %c0_10] : memref<1x1xf32, #tpu.memory_space<smem>>
    %11 = vector.broadcast %10 : f32 to vector<1x128xf32>
    %12 = arith.addf %9, %11 : vector<1x128xf32>
    %c0_11 = arith.constant 0 : index
    %c0_12 = arith.constant 0 : index
    %13 = vector.load %arg6[%c0_11, %c0_12] : memref<1x128xf32, #tpu.memory_space<vmem>>, vector<1x128xf32>
    tpu.vector_store %arg6[%c0_11, %c0_12], %12 {strides = array<i32>} : memref<1x128xf32, #tpu.memory_space<vmem>>, vector<1x128xf32>,
    return
  }
  func.func @transform_0(%arg0: i32) -> (i32, i32) {
    %c0_i32 = arith.constant 0 : i32
    %c0_i32_0 = arith.constant 0 : i32
    return %arg0, %c0_i32 : i32, i32
  }
  func.func @transform_1(%arg0: i32) -> (i32, i32) {
    %c0_i32 = arith.constant 0 : i32
    %c0_i32_0 = arith.constant 0 : i32
    %c0_i32_1 = arith.constant 0 : i32
    return %c0_i32, %c0_i32_0 : i32, i32
  }
  func.func @transform_2(%arg0: i32) -> (i32, i32) {
    %c0_i32 = arith.constant 0 : i32
    %c0_i32_0 = arith.constant 0 : i32
    %c0_i32_1 = arith.constant 0 : i32
    return %c0_i32, %c0_i32_0 : i32, i32
  }
  func.func @transform_3(%arg0: i32) -> (i32, i32) {
    %c0_i32 = arith.constant 0 : i32
    %c0_i32_0 = arith.constant 0 : i32
    %c0_i32_1 = arith.constant 0 : i32
    return %c0_i32, %c0_i32_0 : i32, i32
  }
  func.func @transform_4(%arg0: i32) -> (i32, i32) {
    %c0_i32 = arith.constant 0 : i32
    %c0_i32_0 = arith.constant 0 : i32
    %c0_i32_1 = arith.constant 0 : i32
    return %c0_i32, %c0_i32_0 : i32, i32
  }
  func.func @transform_5(%arg0: i32) -> (i32, i32) {
    %c0_i32 = arith.constant 0 : i32
    %c0_i32_0 = arith.constant 0 : i32
    return %c0_i32, %arg0 : i32, i32
  }
}

</mosaic_0001>

<llo_original>
// kernel: tpu_custom_call.1
$region0: #{tpu_custom_call.1}
  #allocation0 [shape = 'u32[]', space=smem, size = 0x4, offset = 0x4, fixed_abs, tag = 'smem constant byte address 0x4 - core index']
  #allocation1 [shape = 'u32[72,128]{1,0:T(1,128)}', space=vmem, size = 0x9000, scoped, tag = 'internal scratch']
  #allocation2 [shape = 'f32[1,1]{1,0:T(1,128)S(6)}', space=smem, size = 0x200, scoped, tag = 'scoped memory for tpu_custom_call.1']
  %s0 = inlined_call_operand.hbm [shape: bf16[8,32], index: 0, kind: input, shape index: {}]
  %s1 = inlined_call_operand.hbm [shape: bf16[32,128], index: 1, kind: input, shape index: {}]
  %s2 = inlined_call_operand.vmem [shape: f32[1,128], index: 2, kind: input, shape index: {}]
  %s3 = inlined_call_operand.vmem [shape: f32[1,128], index: 3, kind: input, shape index: {}]
  %s4 = inlined_call_operand.<no memory space> [shape: f32[1,1], index: 4, kind: input, shape index: {}]
  %s5 = inlined_call_operand.hbm [shape: f32[1,128], index: 5, kind: output, shape index: {}]
  %s6 = sld [smem:[#allocation0]]
  $region38: #{tpu_custom_call.1} parent=0
    _
  %s8 = ssub.s32 1, %s6
  %s9 = scalar_select 0, %s8, %s6
  %10 = sst [smem:[#allocation2]] %s4
  $region1: #{tpu_custom_call.1} parent=0
    #allocation3 [shape = 'u8[32768]{0}', space=vmem, size = 0x8000, scoped, tag = 'input window, operand 0, single buffered']
    #allocation4 [shape = 's32[1]{0}', space=sflag, size = 0x4, scoped, tag = 'scoped memory for tpu_custom_call.1']
    #allocation5 [shape = 's32[1]{0}', space=sflag, size = 0x4, scoped, tag = 'scoped memory for tpu_custom_call.1']
    #allocation6 [shape = 'u8[8192]{0}', space=vmem, size = 0x2000, scoped, tag = 'input window, operand 1, single buffered']
    #allocation7 [shape = 's32[1]{0}', space=sflag, size = 0x4, scoped, tag = 'scoped memory for tpu_custom_call.1']
    #allocation8 [shape = 'u8[512]{0}', space=vmem, size = 0x400, scoped, tag = 'output window, operand 0, single buffered']
    %11 = vsyncpa [#allocation4], 0
    %12 = vsyncpa [#allocation7], 0
    %13 = vsyncpa [#allocation5], 0
    // Predicated region
    $region2: #{tpu_custom_call.1} parent=1 // pred_check
      _
    $region3: #{tpu_custom_call.1} parent=1 // pred_check_branch
      %15 = sbr.rel (0) target = $region5
    $region4: #{tpu_custom_call.1} parent=1 // pred_region
      %17 = vsyncadd [#allocation4], 960
      %s18 = sshll.u32 %s0, 4
      %s19 = int_to_ptr.hbm [resolvable:$true] %s18
      %s20 = sshll.u32 [#allocation3], 4
      %s21 = int_to_ptr.vmem [resolvable:$true] %s20
      %26 = dma.hbm_to_vmem [thread:$0]  %s19, 64, %s21, [#allocation4], 64, 64, 4
    $region5: #{tpu_custom_call.1} parent=1 // pred_fallthru
      _
    // Predicated region
    $region6: #{tpu_custom_call.1} parent=1 // pred_check
      _
    $region7: #{tpu_custom_call.1} parent=1 // pred_check_branch
      %28 = sbr.rel (0) target = $region9
    $region8: #{tpu_custom_call.1} parent=1 // pred_region
      %30 = vsyncadd [#allocation7], 0
      %s31 = sshll.u32 %s1, 4
      %s32 = int_to_ptr.hbm [resolvable:$true] %s31
      %s33 = sshll.u32 [#allocation6], 4
      %s34 = int_to_ptr.vmem [resolvable:$true] %s33
      %39 = dma.hbm_to_vmem [thread:$0]  %s32, 256, %s34, [#allocation7], 64, 64, 4
    $region9: #{tpu_custom_call.1} parent=1 // pred_fallthru
      _
    // Predicated region
    $region10: #{tpu_custom_call.1} parent=1 // pred_check
      _
    $region11: #{tpu_custom_call.1} parent=1 // pred_check_branch
      %41 = sbr.rel (0) target = $region13
    $region12: #{tpu_custom_call.1} parent=1 // pred_region
      _
    $region13: #{tpu_custom_call.1} parent=1 // pred_fallthru
      _
    // Predicated region
    $region14: #{tpu_custom_call.1} parent=1 // pred_check
      _
    $region15: #{tpu_custom_call.1} parent=1 // pred_check_branch
      %43 = sbr.rel (0) target = $region17
    $region16: #{tpu_custom_call.1} parent=1 // pred_region
      _
    $region17: #{tpu_custom_call.1} parent=1 // pred_fallthru
      _
    // Predicated region
    $region18: #{tpu_custom_call.1} parent=1 // pred_check
      _
    $region19: #{tpu_custom_call.1} parent=1 // pred_check_branch
      %45 = sbr.rel (0) target = $region21
    $region20: #{tpu_custom_call.1} parent=1 // pred_region
      _
    $region21: #{tpu_custom_call.1} parent=1 // pred_fallthru
      _
    // Predicated region
    $region22: #{tpu_custom_call.1} parent=1 // pred_check
      _
    $region23: #{tpu_custom_call.1} parent=1 // pred_check_branch
      %47 = sbr.rel (0) target = $region25
    $region24: #{tpu_custom_call.1} parent=1 // pred_region
      %49 = dma.done [#allocation4], 1024
    $region25: #{tpu_custom_call.1} parent=1 // pred_fallthru
      _
    // Predicated region
    $region26: #{tpu_custom_call.1} parent=1 // pred_check
      _
    $region27: #{tpu_custom_call.1} parent=1 // pred_check_branch
      %51 = sbr.rel (0) target = $region29
    $region28: #{tpu_custom_call.1} parent=1 // pred_region
      %53 = dma.done [#allocation7], 256
    $region29: #{tpu_custom_call.1} parent=1 // pred_fallthru
      _
    %v55 = vld [vmem:[#allocation3] sm:$0xf]
    %v56 = vld [vmem:[#allocation3 + $0x4] sm:$0xf]
    %v57 = vld [vmem:[#allocation3 + $0x8] sm:$0xf]
    %v58 = vld [vmem:[#allocation3 + $0xc] sm:$0xf]
    %v59 = vld [vmem:[#allocation3 + $0x10] sm:$0xf]
    %v60 = vld [vmem:[#allocation3 + $0x14] sm:$0xf]
    %v61 = vld [vmem:[#allocation3 + $0x18] sm:$0xf]
    %v62 = vld [vmem:[#allocation3 + $0x1c] sm:$0xf]
    %v63 = vld [vmem:[#allocation3 + $0x20] sm:$0xf]
    %v64 = vld [vmem:[#allocation3 + $0x24] sm:$0xf]
    %v65 = vld [vmem:[#allocation3 + $0x28] sm:$0xf]
    %v66 = vld [vmem:[#allocation3 + $0x2c] sm:$0xf]
    %v67 = vld [vmem:[#allocation3 + $0x30] sm:$0xf]
    %v68 = vld [vmem:[#allocation3 + $0x34] sm:$0xf]
    %v69 = vld [vmem:[#allocation3 + $0x38] sm:$0xf]
    %v70 = vld [vmem:[#allocation3 + $0x3c] sm:$0xf]
    %v71 = vld [vmem:[#allocation6] sm:$0xf]
    %v72 = vld [vmem:[#allocation6 + $0x4] sm:$0xf]
    %v73 = vld [vmem:[#allocation6 + $0x8] sm:$0xf]
    %v74 = vld [vmem:[#allocation6 + $0xc] sm:$0xf]
    %v75 = vld [vmem:[%s2] sm:$0x1]
    %v77 = vperm.slane %v75, 0
    %v95 = vunpack.c.l.b16 %v55
    %v96 = vunpack.c.l.b16 %v56
    %v97 = vunpack.c.l.b16 %v57
    %v98 = vunpack.c.l.b16 %v58
    %v99 = vunpack.c.l.b16 %v59
    %v100 = vunpack.c.l.b16 %v60
    %v101 = vunpack.c.l.b16 %v61
    %v102 = vunpack.c.l.b16 %v62
    %v103 = vunpack.c.l.b16 %v63
    %v104 = vunpack.c.l.b16 %v64
    %v105 = vunpack.c.l.b16 %v65
    %v106 = vunpack.c.l.b16 %v66
    %v107 = vunpack.c.l.b16 %v67
    %v108 = vunpack.c.l.b16 %v68
    %v109 = vunpack.c.l.b16 %v69
    %v110 = vunpack.c.l.b16 %v70
    %v111 = vpack.c.b16 %v96, %v95
    %v112 = vpack.c.b16 %v98, %v97
    %v113 = vpack.c.b16 %v100, %v99
    %v114 = vpack.c.b16 %v102, %v101
    %v115 = vpack.c.b16 %v104, %v103
    %v116 = vpack.c.b16 %v106, %v105
    %v117 = vpack.c.b16 %v108, %v107
    %v118 = vpack.c.b16 %v110, %v109
    %v123 = vunpack.c.l.b16 %v71
    %v124 = vunpack.c.l.b16 %v72
    %v125 = vunpack.c.l.b16 %v73
    %v126 = vunpack.c.l.b16 %v74
    %v127 = vpack.c.b16 %v124, %v123
    %v128 = vpack.c.b16 %v126, %v125
    %vm131 = vcmask 261120
    %v133 = vsel %vm131, %v111, 0
    %v136 = vsel %vm131, %v112, 0
    %v139 = vsel %vm131, %v113, 0
    %v142 = vsel %vm131, %v114, 0
    %v145 = vsel %vm131, %v115, 0
    %v148 = vsel %vm131, %v116, 0
    %v151 = vsel %vm131, %v117, 0
    %v154 = vsel %vm131, %v118, 0
    %156 = vmatpush.bf16.msra.mxu0 0
    %157 = vmatpush.bf16.msra.mxu0 0
    %158 = vmatpush.bf16.msra.mxu0 0
    %159 = vmatpush.bf16.msra.mxu0 0
    %160 = vmatpush.bf16.msra.mxu0 0
    %161 = vmatpush.bf16.msra.mxu0 0
    %162 = vmatpush.bf16.msra.mxu0 %v128
    %163 = vmatpush.bf16.msra.mxu0 %v127
    %164 = vmatmul.bf16.gmra.mxu0 %v133
    %v165 = vpop.f32.mrf.mxu0
    %v166 = vadd.f32 %v77, %v165
    %v167 = vpop.f32.mrf.mxu0
    %v168 = vadd.f32 %v77, %v167
    %169 = vmatmul.bf16.gmra.mxu0 %v136
    %v170 = vpop.f32.mrf.mxu0
    %v171 = vadd.f32 %v77, %v170
    %v172 = vpop.f32.mrf.mxu0
    %v173 = vadd.f32 %v77, %v172
    %174 = vmatmul.bf16.gmra.mxu0 %v139
    %v175 = vpop.f32.mrf.mxu0
    %v176 = vadd.f32 %v77, %v175
    %v177 = vpop.f32.mrf.mxu0
    %v178 = vadd.f32 %v77, %v177
    %179 = vmatmul.bf16.gmra.mxu0 %v142
    %v180 = vpop.f32.mrf.mxu0
    %v181 = vadd.f32 %v77, %v180
    %v182 = vpop.f32.mrf.mxu0
    %v183 = vadd.f32 %v77, %v182
    %184 = vmatmul.bf16.gmra.mxu0 %v145
    %v185 = vpop.f32.mrf.mxu0
    %v186 = vadd.f32 %v77, %v185
    %v187 = vpop.f32.mrf.mxu0
    %v188 = vadd.f32 %v77, %v187
    %189 = vmatmul.bf16.gmra.mxu0 %v148
    %v190 = vpop.f32.mrf.mxu0
    %v191 = vadd.f32 %v77, %v190
    %v192 = vpop.f32.mrf.mxu0
    %v193 = vadd.f32 %v77, %v192
    %194 = vmatmul.bf16.gmra.mxu0 %v151
    %v195 = vpop.f32.mrf.mxu0
    %v196 = vadd.f32 %v77, %v195
    %v197 = vpop.f32.mrf.mxu0
    %v198 = vadd.f32 %v77, %v197
    %199 = vmatmul.bf16.gmra.mxu0 %v154
    %v200 = vpop.f32.mrf.mxu0
    %v201 = vadd.f32 %v77, %v200
    %v202 = vpop.f32.mrf.mxu0
    %v203 = vadd.f32 %v77, %v202
    %204 = vdwg.mxu0
    %v205 = vmax.f32 %v166, 0.0
    %v206 = vmax.f32 %v168, 0.0
    %v207 = vmax.f32 %v171, 0.0
    %v208 = vmax.f32 %v173, 0.0
    %v209 = vmax.f32 %v176, 0.0
    %v210 = vmax.f32 %v178, 0.0
    %v211 = vmax.f32 %v181, 0.0
    %v212 = vmax.f32 %v183, 0.0
    %v213 = vmax.f32 %v186, 0.0
    %v214 = vmax.f32 %v188, 0.0
    %v215 = vmax.f32 %v191, 0.0
    %v216 = vmax.f32 %v193, 0.0
    %v217 = vmax.f32 %v196, 0.0
    %v218 = vmax.f32 %v198, 0.0
    %v219 = vmax.f32 %v201, 0.0
    %v220 = vmax.f32 %v203, 0.0
    %v221 = vld [vmem:[%s3] sm:$0x1]
    %s222 = sld [smem:[#allocation2]]
    %v223 = vstv %s222
    %224 = vmatpush.xpose.msra.mxu0 %v220
    %225 = vmatpush.xpose.msra.mxu0 %v219
    %226 = vmatpush.xpose.msra.mxu0 %v218
    %227 = vmatpush.xpose.msra.mxu0 %v217
    %228 = vmatpush.xpose.msra.mxu0 %v216
    %229 = vmatpush.xpose.msra.mxu0 %v215
    %230 = vmatpush.xpose.msra.mxu0 %v214
    %231 = vmatpush.xpose.msra.mxu0 %v213
    %232 = vmatpush.xpose.msra.mxu0 %v212
    %233 = vmatpush.xpose.msra.mxu0 %v211
    %234 = vmatpush.xpose.msra.mxu0 %v210
    %235 = vmatpush.xpose.msra.mxu0 %v209
    %236 = vmatpush.xpose.msra.mxu0 %v208
    %237 = vmatpush.xpose.msra.mxu0 %v207
    %238 = vmatpush.xpose.msra.mxu0 %v206
    %239 = vmatpush.xpose.msra.mxu0 %v205
    %240 = vmatmul.f32.gmra.mxu0 %v221
    %v241 = vpop.f32.mrf.mxu0
    %v242 = vadd.f32 %v223, %v241
    %243 = vdwg.mxu0
    %244 = vst [vmem:[#allocation8] sm:$0x1] %v242
    // Predicated region
    $region30: #{tpu_custom_call.1} parent=1 // pred_check
      _
    $region31: #{tpu_custom_call.1} parent=1 // pred_check_branch
      %246 = sbr.rel (0) target = $region33
    $region32: #{tpu_custom_call.1} parent=1 // pred_region
      %248 = vsyncadd [#allocation5], 0
      %s250 = sshll.u32 [#allocation8], 4
      %s251 = int_to_ptr.vmem [resolvable:$true] %s250
      %s252 = sshll.u32 %s5, 4
      %s253 = int_to_ptr.hbm [resolvable:$true] %s252
      %255 = dma.vmem_to_hbm [thread:$0]  %s251, 16, %s253, [#allocation5]
    $region33: #{tpu_custom_call.1} parent=1 // pred_fallthru
      _
    // Predicated region
    $region34: #{tpu_custom_call.1} parent=1 // pred_check
      _
    $region35: #{tpu_custom_call.1} parent=1 // pred_check_branch
      %257 = sbr.rel (0) target = $region37
    $region36: #{tpu_custom_call.1} parent=1 // pred_region
      %259 = dma.done [#allocation5], 16
    $region37: #{tpu_custom_call.1} parent=1 // pred_fallthru
      _
    %260 = vsyncpa [#allocation4], 1
    %261 = vsyncpa [#allocation7], 1
    %262 = vsyncpa [#allocation5], 1

</llo_original>
